<compile_context>
chip_gen: v7x
topology: tpu7x:2x2x1
jax: 0.10.0
libtpu: 0.0.40
codegen_flags: <defaults>
</compile_context>

<pallas_src>
import functools

import jax
import jax.numpy as jnp
from jax import lax
from jax.experimental import pallas as pl
from jax.experimental.pallas import tpu as pltpu

_IGNORE_INDEX = -100  # PyTorch nn.CrossEntropyLoss default
_LANE = 128
_LANE_CAP = 32768  # lifted lane cap (was 2048)


# ----------------------------------------------------------------------------
# Generation-aware sizing
# ----------------------------------------------------------------------------
def _tpu_vmem_capacity_bytes(default=64 * 1024 * 1024):
    """Physical VMEM per TensorCore (v5e/v6e: 128 MiB, v7x: 64 MiB)."""
    try:
        cap = getattr(pltpu.get_tpu_info(), "vmem_capacity_bytes", None)
        if cap:
            return int(cap)
    except Exception:
        pass
    return default


def _vmem_limit_and_block_budget():
    cap = _tpu_vmem_capacity_bytes()
    # Scoped VMEM limit for the kernel: ~48 MiB on v7x, ~96 MiB on v5e/v6e.
    vmem_limit = min((cap * 3) // 4, 112 * 1024 * 1024)
    # Logits bytes per block (double-buffered by the pipeline => 2x this in VMEM).
    block_budget = min(cap // 8, 8 * 1024 * 1024)
    return vmem_limit, block_budget


def _pick_tile_l(seq_len, row_bytes, block_budget):
    """Lane (seq) tile: full seq if it fits, else a large power-of-two tile."""
    if seq_len * row_bytes <= block_budget:
        return seq_len  # full-dim block: always layout-legal
    max_lanes = min(block_budget // max(row_bytes, 1), _LANE_CAP)
    if max_lanes >= 512:
        tile = 512
        while tile * 2 <= max_lanes:
            tile *= 2
        return tile
    return max(_LANE, (max_lanes // _LANE) * _LANE)


def _pick_tb(bs, tile_l, row_bytes, block_budget):
    """Batch rows folded per block (divisor of bs; keeps >=2 batch programs)."""
    per_row = max(tile_l * row_bytes, 1)
    tb_budget = max(block_budget // per_row, 1)
    tb_cap = 1 if bs <= 1 else -(-bs // 2)  # cdiv(bs, 2): >=2 programs for v7x
    tb_max = max(1, min(tb_budget, tb_cap, bs))
    tb = 1
    for d in range(1, tb_max + 1):
        if bs % d == 0:
            tb = d
    return tb


def _pick_chunk_l(tile_l, tb, n_classes):
    """Lane width of in-kernel compute sub-slices (bounds vreg/VMEM spills)."""
    if tb * n_classes * tile_l * 4 <= 256 * 1024:
        return tile_l  # whole-block working set is small -> single shot
    for c in (1024, 512, 256, 128):
        if c <= tile_l and tb * n_classes * c * 4 <= 256 * 1024:
            return c
    return _LANE


# ----------------------------------------------------------------------------
# Kernel
# ----------------------------------------------------------------------------
def _ce_block_kernel(pred_ref, tgt_ref, loss_ref, *, tb, n_classes, tile_l,
                     chunk_l, seq_len, ignore_index, ragged_seq):
    """One (batch-block, seq-tile) step of softmax cross-entropy.

    pred_ref : (TB, C, TILE_L)  model dtype (native NCL layout, seq on lanes)
    tgt_ref  : (TB, 1, TILE_L)  int32
    loss_ref : (1, 1, 128)      f32 -- RESIDENT accumulator across seq tiles
    """
    l_idx = pl.program_id(1)

    @pl.when(l_idx == 0)
    def _init():
        loss_ref[...] = jnp.zeros_like(loss_ref)

    def chunk_loss(start, width):
        # Single sweep: `shifted` feeds both the stable LSE and the target pick.
        logits = pred_ref[:, :, pl.ds(start, width)].astype(jnp.float32)  # (TB,C,w)
        tgt = tgt_ref[:, :, pl.ds(start, width)]                          # (TB,1,w)
        col_max = jnp.max(logits, axis=1, keepdims=True)                  # (TB,1,w)
        shifted = logits - col_max
        lse = jnp.log(jnp.sum(jnp.exp(shifted), axis=1, keepdims=True))   # (TB,1,w)
        cls_iota = lax.broadcasted_iota(jnp.int32, (tb, n_classes, width), 1)
        tgt_shift = jnp.sum(jnp.where(cls_iota == tgt, shifted, 0.0),
                            axis=1, keepdims=True)                        # (TB,1,w)
        per_tok = lse - tgt_shift

        valid = tgt != ignore_index
        if ragged_seq:  # statically emitted only when the last seq tile overhangs
            pos = (l_idx * tile_l + start
                   + lax.broadcasted_iota(jnp.int32, (tb, 1, width), 2))
            valid = jnp.logical_and(valid, pos < seq_len)
        # where (select), NOT multiply-by-mask: garbage inf/NaN must not leak.
        return jnp.sum(jnp.where(valid, per_tok, 0.0))

    if chunk_l >= tile_l:
        tile_loss = chunk_loss(0, tile_l)
    else:
        n_full = tile_l // chunk_l
        rem = tile_l - n_full * chunk_l

        def body(c, acc):
            start = pl.multiple_of(c * chunk_l, _LANE)
            return acc + chunk_loss(start, chunk_l)

        tile_loss = lax.fori_loop(0, n_full, body, jnp.float32(0.0),
                                  unroll=min(n_full, 8))
        if rem > 0:
            tile_loss = tile_loss + chunk_loss(n_full * chunk_l, rem)

    loss_ref[...] = loss_ref[...] + tile_loss


# ----------------------------------------------------------------------------
# Wrapper
# ----------------------------------------------------------------------------
def reshaped_cross_entropy_loss(prediction, target, epoch=0, *,
                                block_budget_bytes=None):
    """JAX/Pallas equivalent of ReshapedCrossEntropyLoss(loss='CE').forward.

    prediction: (bs, n_classes, seq_len) float (f32 or bf16 — no pre-cast needed)
    target:     (bs, seq_len) integer labels (-100 == ignore, as in torch)
    epoch:      unused (kept for signature parity with the PyTorch module)
    """
    del epoch
    bs, n_classes, seq_len = prediction.shape
    # Tiny int reshape only (the big logits tensor is consumed in-place).
    tgt3d = target.astype(jnp.int32).reshape(bs, 1, seq_len)

    vmem_limit, auto_budget = _vmem_limit_and_block_budget()
    budget = auto_budget if block_budget_bytes is None else block_budget_bytes

    row_bytes = n_classes * prediction.dtype.itemsize
    tile_l = _pick_tile_l(seq_len, row_bytes, budget)
    tb = _pick_tb(bs, tile_l, row_bytes, budget)
    chunk_l = _pick_chunk_l(tile_l, tb, n_classes)

    n_b_tiles = bs // tb
    n_l_tiles = pl.cdiv(seq_len, tile_l)
    ragged_seq = (seq_len % tile_l) != 0

    kernel = functools.partial(
        _ce_block_kernel,
        tb=tb, n_classes=n_classes, tile_l=tile_l, chunk_l=chunk_l,
        seq_len=seq_len, ignore_index=_IGNORE_INDEX, ragged_seq=ragged_seq,
    )

    cost = pl.CostEstimate(
        flops=5 * bs * n_classes * seq_len,
        transcendentals=bs * seq_len * (n_classes + 1),
        bytes_accessed=(prediction.size * prediction.dtype.itemsize
                        + tgt3d.size * 4 + n_b_tiles * 128 * 4),
    )

    loss_parts = pl.pallas_call(
        kernel,
        out_shape=jax.ShapeDtypeStruct((n_b_tiles, 1, 128), jnp.float32),
        grid=(n_b_tiles, n_l_tiles),
        in_specs=[
            # Native NCL logits: class axis (small) on sublanes, seq on lanes.
            pl.BlockSpec((tb, n_classes, tile_l), lambda b, l: (b, 0, l)),
            # Lane-dense int32 targets.
            pl.BlockSpec((tb, 1, tile_l), lambda b, l: (b, 0, l)),
        ],
        # Resident accumulator: index_map ignores the seq-tile axis -> one
        # writeback per batch block instead of one tiny store per grid step.
        out_specs=pl.BlockSpec((1, 1, 128), lambda b, l: (b, 0, 0)),
        compiler_params=pltpu.CompilerParams(
            dimension_semantics=("parallel", "arbitrary"),
            vmem_limit_bytes=vmem_limit,
        ),
        cost_estimate=cost,
    )(prediction, tgt3d)

    total_loss = jnp.sum(loss_parts[:, 0, 0])
    # Valid-token count needs only the labels: plain XLA, no kernel output.
    total_cnt = jnp.sum((target != _IGNORE_INDEX).astype(jnp.float32))
    return total_loss / total_cnt


# ----------------------------------------------------------------------------
# Pure-JAX reference (matches torch.nn.CrossEntropyLoss, mean reduction)
# ----------------------------------------------------------------------------
def _reference_ce(prediction, target, ignore_index=_IGNORE_INDEX):
    bs, n_classes, seq_len = prediction.shape
    logits = jnp.transpose(prediction, (0, 2, 1)).reshape(bs * seq_len, n_classes)
    logits = logits.astype(jnp.float32)
    tgt = target.reshape(bs * seq_len).astype(jnp.int32)
    valid = tgt != ignore_index
    logp = jax.nn.log_softmax(logits, axis=-1)
    safe_tgt = jnp.where(valid, tgt, 0)
    nll = -jnp.take_along_axis(logp, safe_tgt[:, None], axis=-1)[:, 0]
    return jnp.sum(jnp.where(valid, nll, 0.0)) / jnp.sum(valid)


if __name__ == "__main__":
    key = jax.random.PRNGKey(0)
    k_pred, k_tgt, k_pred2, k_tgt2 = jax.random.split(key, 4)

    # Small shape matching the module's (bs, n_classes, seq_len) NCL layout.
    bs, n_classes, seq_len = 2, 4, 8
    prediction = jax.random.normal(k_pred, (bs, n_classes, seq_len), dtype=jnp.float32)
    target = jax.random.randint(k_tgt, (bs, seq_len), 0, n_classes, dtype=jnp.int32)
    target = target.at[0, 3].set(_IGNORE_INDEX)  # exercise ignore_index

    loss = jax.block_until_ready(reshaped_cross_entropy_loss(prediction, target, epoch=0))
    ref = _reference_ce(prediction, target)
    assert jnp.allclose(loss, ref, atol=1e-5, rtol=1e-5), (loss, ref)

    # Second run with a tiny forced block budget: exercises multi-seq-tile
    # accumulation + ragged last tile on still-small shapes.
    bs2, c2, s2 = 4, 5, 300
    pred2 = jax.random.normal(k_pred2, (bs2, c2, s2), dtype=jnp.float32)
    tgt2 = jax.random.randint(k_tgt2, (bs2, s2), 0, c2, dtype=jnp.int32)
    loss2 = jax.block_until_ready(
        reshaped_cross_entropy_loss(pred2, tgt2, epoch=0, block_budget_bytes=4096))
    ref2 = _reference_ce(pred2, tgt2)
    assert jnp.allclose(loss2, ref2, atol=1e-4, rtol=1e-4), (loss2, ref2)

    print("KERNEL_OK")
</pallas_src>

<mosaic_0001>
module attributes {stable_mosaic.version = 11 : i64} {
  func.func @_ce_block_kernel(%arg0: i32, %arg1: i32, %arg2: memref<1x4x8xf32, #tpu.memory_space<vmem>>, %arg3: memref<1x1x8xi32, #tpu.memory_space<vmem>>, %arg4: memref<1x1x128xf32, #tpu.memory_space<vmem>>) attributes {dimension_semantics = [#tpu.dimension_semantics<parallel>, #tpu.dimension_semantics<arbitrary>], iteration_bounds = array<i64: 2, 1>, scalar_prefetch = 0 : i64, scratch_operands = 0 : i64, tpu.core_type = #tpu.core_type<tc>, window_params = [{transform_indices = @transform_0, window_bounds = array<i64: 1, 4, 8>}, {transform_indices = @transform_1, window_bounds = array<i64: 1, 1, 8>}, {transform_indices = @transform_2, window_bounds = array<i64: 1, 1, 128>}]} {
    %c0_i32 = arith.constant 0 : i32
    %0 = arith.cmpi eq, %arg1, %c0_i32 : i32
    %1 = arith.extui %0 : i1 to i32
    %c0_i32_0 = arith.constant 0 : i32
    %2 = arith.cmpi ne, %1, %c0_i32_0 : i32
    scf.if %2 {
      %cst_17 = arith.constant 0.000000e+00 : f32
      %33 = vector.broadcast %cst_17 : f32 to vector<1x1x128xf32>
      %c0_18 = arith.constant 0 : index
      %c0_19 = arith.constant 0 : index
      %c0_20 = arith.constant 0 : index
      %34 = vector.load %arg4[%c0_18, %c0_19, %c0_20] : memref<1x1x128xf32, #tpu.memory_space<vmem>>, vector<1x1x128xf32>
      tpu.vector_store %arg4[%c0_18, %c0_19, %c0_20], %33 {strides = array<i32>} : memref<1x1x128xf32, #tpu.memory_space<vmem>>, vector<1x1x128xf32>,
    } else {
    }
    %c0 = arith.constant 0 : index
    %c0_1 = arith.constant 0 : index
    %c0_2 = arith.constant 0 : index
    %3 = vector.load %arg2[%c0, %c0_1, %c0_2] : memref<1x4x8xf32, #tpu.memory_space<vmem>>, vector<1x4x8xf32>
    %c0_3 = arith.constant 0 : index
    %c0_4 = arith.constant 0 : index
    %c0_5 = arith.constant 0 : index
    %4 = vector.load %arg3[%c0_3, %c0_4, %c0_5] : memref<1x1x8xi32, #tpu.memory_space<vmem>>, vector<1x1x8xi32>
    %cst = arith.constant dense<0xFF800000> : vector<1x8xf32>
    %5 = vector.multi_reduction <maximumf>, %3, %cst [1] : vector<1x4x8xf32> to vector<1x8xf32>
    %6 = vector.shape_cast %5 : vector<1x8xf32> to vector<1x1x8xf32>
    %7 = vector.broadcast %6 : vector<1x1x8xf32> to vector<1x4x8xf32>
    %8 = arith.subf %3, %7 : vector<1x4x8xf32>
    %9 = math.exp %8 : vector<1x4x8xf32>
    %cst_6 = arith.constant dense<0.000000e+00> : vector<1x8xf32>
    %10 = vector.multi_reduction <add>, %9, %cst_6 [1] : vector<1x4x8xf32> to vector<1x8xf32>
    %11 = vector.shape_cast %10 : vector<1x8xf32> to vector<1x1x8xf32>
    %12 = math.log %11 : vector<1x1x8xf32>
    %13 = tpu.iota {dimensions = array<i32: 1>} : vector<1x4x8xi32>
    %14 = vector.broadcast %4 : vector<1x1x8xi32> to vector<1x4x8xi32>
    %15 = arith.cmpi eq, %13, %14 : vector<1x4x8xi32>
    %cst_7 = arith.constant 0.000000e+00 : f32
    %16 = vector.broadcast %cst_7 : f32 to vector<1x4x8xf32>
    %17 = arith.select %15, %8, %16 : vector<1x4x8xi1>, vector<1x4x8xf32>
    %cst_8 = arith.constant dense<0.000000e+00> : vector<1x8xf32>
    %18 = vector.multi_reduction <add>, %17, %cst_8 [1] : vector<1x4x8xf32> to vector<1x8xf32>
    %19 = vector.shape_cast %18 : vector<1x8xf32> to vector<1x1x8xf32>
    %20 = arith.subf %12, %19 : vector<1x1x8xf32>
    %c-100_i32 = arith.constant -100 : i32
    %21 = vector.broadcast %c-100_i32 : i32 to vector<1x1x8xi32>
    %22 = arith.cmpi ne, %4, %21 : vector<1x1x8xi32>
    %cst_9 = arith.constant 0.000000e+00 : f32
    %23 = vector.broadcast %cst_9 : f32 to vector<1x1x8xf32>
    %24 = arith.select %22, %20, %23 : vector<1x1x8xi1>, vector<1x1x8xf32>
    %25 = vector.shape_cast %24 : vector<1x1x8xf32> to vector<1x1x1x8xf32>
    %cst_10 = arith.constant dense<0.000000e+00> : vector<1xf32>
    %26 = vector.multi_reduction <add>, %25, %cst_10 [1, 2, 3] : vector<1x1x1x8xf32> to vector<1xf32>
    %27 = vector.shape_cast %26 : vector<1xf32> to vector<1x1x1x1xf32>
    %28 = vector.extract %27[0, 0, 0, 0] : f32 from vector<1x1x1x1xf32>
    %c0_11 = arith.constant 0 : index
    %c0_12 = arith.constant 0 : index
    %c0_13 = arith.constant 0 : index
    %29 = vector.load %arg4[%c0_11, %c0_12, %c0_13] : memref<1x1x128xf32, #tpu.memory_space<vmem>>, vector<1x1x128xf32>
    %30 = vector.broadcast %28 : f32 to vector<1x1x128xf32>
    %31 = arith.addf %29, %30 : vector<1x1x128xf32>
    %c0_14 = arith.constant 0 : index
    %c0_15 = arith.constant 0 : index
    %c0_16 = arith.constant 0 : index
    %32 = vector.load %arg4[%c0_14, %c0_15, %c0_16] : memref<1x1x128xf32, #tpu.memory_space<vmem>>, vector<1x1x128xf32>
    tpu.vector_store %arg4[%c0_14, %c0_15, %c0_16], %31 {strides = array<i32>} : memref<1x1x128xf32, #tpu.memory_space<vmem>>, vector<1x1x128xf32>,
    return
  }
  func.func @transform_0(%arg0: i32, %arg1: i32) -> (i32, i32, i32) {
    %c0_i32 = arith.constant 0 : i32
    %c0_i32_0 = arith.constant 0 : i32
    return %arg0, %c0_i32, %arg1 : i32, i32, i32
  }
  func.func @transform_1(%arg0: i32, %arg1: i32) -> (i32, i32, i32) {
    %c0_i32 = arith.constant 0 : i32
    %c0_i32_0 = arith.constant 0 : i32
    return %arg0, %c0_i32, %arg1 : i32, i32, i32
  }
  func.func @transform_2(%arg0: i32, %arg1: i32) -> (i32, i32, i32) {
    %c0_i32 = arith.constant 0 : i32
    %c0_i32_0 = arith.constant 0 : i32
    %c0_i32_1 = arith.constant 0 : i32
    return %arg0, %c0_i32, %c0_i32_0 : i32, i32, i32
  }
}

</mosaic_0001>

<llo_original>
// kernel: tpu_custom_call.1
$region0: #{tpu_custom_call.1}
  #allocation0 [shape = 'u32[]', space=smem, size = 0x4, offset = 0x4, fixed_abs, tag = 'smem constant byte address 0x4 - core index']
  #allocation1 [shape = 'u32[144,128]{1,0:T(1,128)}', space=vmem, size = 0x12000, scoped, tag = 'internal scratch']
  %s0 = inlined_call_operand.hbm [shape: f32[2,4,8], index: 0, kind: input, shape index: {}]
  %s1 = inlined_call_operand.vmem [shape: s32[2,1,8], index: 1, kind: input, shape index: {}]
  %s2 = inlined_call_operand.hbm [shape: f32[2,1,128], index: 2, kind: output, shape index: {}]
  %s3 = sld [smem:[#allocation0]]
  $region49: #{tpu_custom_call.1} parent=0
    _
  %s5 = ssub.s32 1, %s3
  %s6 = scalar_select 0, %s5, %s3
  $region1: #{tpu_custom_call.1} parent=0
    #allocation2 [shape = 'u8[4096]{0}', space=vmem, size = 0x1000, scoped, tag = 'input window, operand 0']
    #allocation3 [shape = 's32[2]{0}', space=sflag, size = 0x8, scoped, tag = 'scoped memory for tpu_custom_call.1']
    #allocation4 [shape = 's32[2]{0}', space=sflag, size = 0x8, scoped, tag = 'scoped memory for tpu_custom_call.1']
    #allocation5 [shape = 'u8[1024]{0}', space=vmem, size = 0x400, scoped, tag = 'output window, operand 0']
    %7 = vsyncpa [#allocation3], 0
    %s8 = scalar_lea.sflag [#allocation3], 1
    %9 = vsyncpa %s8, 0
    %10 = vsyncpa [#allocation4], 0
    %s11 = scalar_lea.sflag [#allocation4], 1
    %12 = vsyncpa %s11, 0
    loop: start=0, step=1, limit=4
    $region2: #{tpu_custom_call.1} parent=1 // loop_pre_header
      _
    $region3: #{tpu_custom_call.1} parent=1 // loop_header
      %s14 = sphi 0, %s18
      %p15 = scmp.ge.s32.totalorder %s14, 4
      %s21 = sphi 0, %s33
      %s22 = sphi 0, %s29
      %s23 = sphi 0, %s21
      %s24 = sphi 0, %s22
      %s25 = sphi 0, %s23
      %s26 = sphi 0, %s24
      %s38 = sphi 0, %s40
      %s41 = sphi 0, %s38
      %s42 = sphi 0, %s41
      %s58 = sphi 0, %s42
      %s66 = sphi 0, %s68
      %s69 = sphi 0, %s66
      %s70 = sphi 0, %s69
      %s86 = sphi 0, %s70
      %s92 = sphi 0, %s94
      %s95 = sphi 0, %s92
      %s96 = sphi 0, %s95
      %s112 = sphi 0, %s96
    $region4: #{tpu_custom_call.1} parent=1 // loop_header_branch
      %17 = sbr.rel (%p15) target = $region8
    $region5: #{tpu_custom_call.1} parent=1 // loop_body
      %s19 = ssub.s32 %s14, 1
      %s20 = ssub.s32 %s14, 2
      %s27 = sadd.s32 1, %s22
      %p28 = scmp.ge.s32.totalorder %s27, 1
      %s29 = scalar_select %p28, 0, %s27
      %s30 = sadd.s32 1, %s21
      %s31 = scalar_select %p28, %s30, %s21
      %p32 = scmp.ge.s32.totalorder %s31, 2
      %s33 = scalar_select %p32, 0, %s31
      %s34 = ssub.s32 %s21, %s33
      %s35 = ssub.s32 %s22, %s29
      %s36 = sor.u32 %s34, %s35
      %p37 = scmp.eq.s32.totalorder %s36, 0
      %s39 = sadd.s32 %s38, 1
      %s40 = scalar_select %p37, %s38, %s39
      %p43 = pneg %p37
      %p44 = scmp.eq.s32.totalorder %s14, 1
      %p45 = por %p43, %p44
      %p46 = scmp.ne.s32.totalorder %s38, %s41
      %p47 = scmp.eq.s32.totalorder %s14, 0
      %p48 = por %p46, %p47
      %p49 = scmp.ne.s32.totalorder %s38, %s41
      %p50 = scmp.eq.s32.totalorder %s19, 1
      %p51 = por %p49, %p50
      %p52 = scmp.ne.s32.totalorder %s41, %s42
      %p53 = scmp.eq.s32.totalorder %s19, 0
      %p54 = por %p52, %p53
      %p55 = scmp.ne.s32.totalorder %s41, %s42
      %p56 = scmp.eq.s32.totalorder %s20, 1
      %p57 = por %p55, %p56
      %p59 = scmp.ne.s32.totalorder %s42, %s58
      %p60 = scmp.eq.s32.totalorder %s20, 0
      %p61 = por %p59, %p60
      %s62 = ssub.s32 %s21, %s33
      %s63 = ssub.s32 %s22, %s29
      %s64 = sor.u32 %s62, %s63
      %p65 = scmp.eq.s32.totalorder %s64, 0
      %s67 = sadd.s32 %s66, 1
      %s68 = scalar_select %p65, %s66, %s67
      %p71 = pneg %p65
      %p72 = scmp.eq.s32.totalorder %s14, 1
      %p73 = por %p71, %p72
      %p74 = scmp.ne.s32.totalorder %s66, %s69
      %p75 = scmp.eq.s32.totalorder %s14, 0
      %p76 = por %p74, %p75
      %p77 = scmp.ne.s32.totalorder %s66, %s69
      %p78 = scmp.eq.s32.totalorder %s19, 1
      %p79 = por %p77, %p78
      %p80 = scmp.ne.s32.totalorder %s69, %s70
      %p81 = scmp.eq.s32.totalorder %s19, 0
      %p82 = por %p80, %p81
      %p83 = scmp.ne.s32.totalorder %s69, %s70
      %p84 = scmp.eq.s32.totalorder %s20, 1
      %p85 = por %p83, %p84
      %p87 = scmp.ne.s32.totalorder %s70, %s86
      %p88 = scmp.eq.s32.totalorder %s20, 0
      %p89 = por %p87, %p88
      %s90 = ssub.s32 %s21, %s33
      %p91 = scmp.eq.s32.totalorder %s90, 0
      %s93 = sadd.s32 %s92, 1
      %s94 = scalar_select %p91, %s92, %s93
      %p97 = pneg %p91
      %p98 = scmp.eq.s32.totalorder %s14, 1
      %p99 = por %p97, %p98
      %p100 = scmp.ne.s32.totalorder %s92, %s95
      %p101 = scmp.eq.s32.totalorder %s14, 0
      %p102 = por %p100, %p101
      %p103 = scmp.ne.s32.totalorder %s92, %s95
      %p104 = scmp.eq.s32.totalorder %s19, 1
      %p105 = por %p103, %p104
      %p106 = scmp.ne.s32.totalorder %s95, %s96
      %p107 = scmp.eq.s32.totalorder %s19, 0
      %p108 = por %p106, %p107
      %p109 = scmp.ne.s32.totalorder %s95, %s96
      %p110 = scmp.eq.s32.totalorder %s20, 1
      %p111 = por %p109, %p110
      %p113 = scmp.ne.s32.totalorder %s96, %s112
      %p114 = scmp.eq.s32.totalorder %s20, 0
      %p115 = por %p113, %p114
      %p116 = scmp.le.s32.totalorder 1, %s14
      %p117 = scmp.lt.s32.totalorder %s14, 3
      %p118 = pnand %p116, %p117
      %p119 = pneg %p118
      // Predicated region
      $region9: #{tpu_custom_call.1} parent=5 // pred_check
        _
      $region10: #{tpu_custom_call.1} parent=5 // pred_check_branch
        %121 = sbr.rel (%p118) target = $region12
      $region11: #{tpu_custom_call.1} parent=5 // pred_region
        %s122 = ssub.s32 %s14, 1
      $region12: #{tpu_custom_call.1} parent=5 // pred_fallthru
        _
      %p123 = scmp.lt.s32.totalorder %s14, 2
      // Predicated region
      $region13: #{tpu_custom_call.1} parent=5 // pred_check
        %p124 = pneg %p123
      $region14: #{tpu_custom_call.1} parent=5 // pred_check_branch
        %126 = sbr.rel (%p124) target = $region16
      $region15: #{tpu_custom_call.1} parent=5 // pred_region
        // Predicated region
        $region17: #{tpu_custom_call.1} parent=15 // pred_check
          %p127 = pneg %p48
        $region18: #{tpu_custom_call.1} parent=15 // pred_check_branch
          %129 = sbr.rel (%p127) target = $region20
        $region19: #{tpu_custom_call.1} parent=15 // pred_region
          %s130 = sand.u32 %s38, 1
          %s131 = scalar_lea.sflag [#allocation3], %s130
          %s132 = sand.u32 %s38, 1
          %s133 = smul.addr %s132, 4
          %s134 = scalar_lea.vmem [#allocation2], %s133
          %s136 = ssub.s32 64, 64
          %137 = vsyncadd %s131, %s136
          %s138 = sadd.s32 %s22, %s21
          %s139 = smul.addr %s138, 64
          %s140 = scalar_lea.hbm %s0, %s139
          %s142 = sshll.u32 %s134, 4
          %s143 = int_to_ptr.vmem [resolvable:$true] %s142
          %145 = dma.hbm_to_vmem [thread:$0]  %s140, 64, %s143, %s131
        $region20: #{tpu_custom_call.1} parent=15 // pred_fallthru
          _
        // Predicated region
        $region21: #{tpu_custom_call.1} parent=15 // pred_check
          %p146 = pneg %p76
        $region22: #{tpu_custom_call.1} parent=15 // pred_check_branch
          %148 = sbr.rel (%p146) target = $region24
        $region23: #{tpu_custom_call.1} parent=15 // pred_region
          %p149 = scmp.lt.s32.totalorder %s21, 1
          %s150 = scalar_select %p149, %s21, 1
          %p151 = scmp.lt.s32.totalorder %s22, 0
          %s152 = scalar_select %p151, %s22, 0
          %s153 = sadd.s32 %s152, %s150
          %s154 = scalar_lea.vmem %s1, %s153
        $region24: #{tpu_custom_call.1} parent=15 // pred_fallthru
          _
      $region16: #{tpu_custom_call.1} parent=5 // pred_fallthru
        _
      %p155 = scmp.le.s32.totalorder 1, %s14
      %p156 = scmp.lt.s32.totalorder %s14, 3
      %p157 = pnand %p155, %p156
      %p158 = pneg %p157
      // Predicated region
      $region25: #{tpu_custom_call.1} parent=5 // pred_check
        _
      $region26: #{tpu_custom_call.1} parent=5 // pred_check_branch
        %160 = sbr.rel (%p157) target = $region28
      $region27: #{tpu_custom_call.1} parent=5 // pred_region
        %s161 = ssub.s32 %s14, 1
        %s162 = sand.u32 %s41, 1
        %s163 = scalar_lea.sflag [#allocation3], %s162
        %s164 = sand.u32 %s41, 1
        %s165 = smul.addr %s164, 4
        %s166 = scalar_lea.vmem [#allocation2], %s165
        // Predicated region
        $region29: #{tpu_custom_call.1} parent=27 // pred_check
          %p167 = pneg %p54
        $region30: #{tpu_custom_call.1} parent=27 // pred_check_branch
          %169 = sbr.rel (%p167) target = $region32
        $region31: #{tpu_custom_call.1} parent=27 // pred_region
          %170 = dma.done %s163, 64
        $region32: #{tpu_custom_call.1} parent=27 // pred_fallthru
          _
        %s171 = sand.u32 %s41, 1
        %s172 = scalar_lea.sflag [#allocation3], %s171
        %s173 = sand.u32 %s41, 1
        %s174 = smul.addr %s173, 4
        %s175 = scalar_lea.vmem [#allocation2], %s174
        %p176 = pneg %p54
        %p177 = pneg %p51
        %p178 = scmp.lt.s32.totalorder %s23, 1
        %s179 = scalar_select %p178, %s23, 1
        %p180 = scmp.lt.s32.totalorder %s24, 0
        %s181 = scalar_select %p180, %s24, 0
        %s182 = sadd.s32 %s181, %s179
        %s183 = scalar_lea.vmem %s1, %s182
        %p184 = pneg %p82
        %p185 = pneg %p79
        %p186 = pneg %p108
        %p187 = pneg %p105
        %s188 = sand.u32 %s95, 1
        %s189 = scalar_lea.sflag [#allocation4], %s188
        %s190 = sand.u32 %s95, 1
        %s191 = scalar_lea.vmem [#allocation5], %s190
        %p192 = scmp.lt.s32.totalorder %s23, 1
        %s193 = scalar_select %p192, %s23, 1
        %p194 = scmp.lt.s32.totalorder %s24, 0
        %s195 = scalar_select %p194, %s24, 0
        %s196 = sadd.s32 %s195, %s193
        %s197 = scalar_lea.vmem %s1, %s196
        %p198 = scmp.eq.s32.totalorder %s24, 0
        // Predicated region
        $region33: #{tpu_custom_call.1} parent=27 // pred_check
          %p199 = pneg %p198
        $region34: #{tpu_custom_call.1} parent=27 // pred_check_branch
          %201 = sbr.rel (%p199) target = $region36
        $region35: #{tpu_custom_call.1} parent=27 // pred_region
          %202 = vst [vmem:[%s191] sm:$0x1] 0.0
        $region36: #{tpu_custom_call.1} parent=27 // pred_fallthru
          _
        %v203 = vld [vmem:[%s166] sm:$0xf]
        %v204 = vld [vmem:[%s197] sm:$0x1]
        %vm205 = vcmask 60416
        %v206 = vsel %vm205, %v203, -inf
        %v207 = vrot.slane %v206, 4
        %v208 = vmax.f32 %v206, %v207
        %v209 = vrot.slane %v208, 2
        %v210 = vmax.f32 %v208, %v209
        %v211 = vrot.slane %v210, 1
        %v212 = vmax.f32 %v210, %v211
        %v213 = vsub.f32 %v203, %v212
        %v214 = vmul.f32 %v213, 1.442695
        %v215 = vpow.pop %v214
        %v216 = vsel %vm205, %v215, 0.0
        %v217 = vrot.slane %v216, 4
        %v218 = vadd.f32 %v216, %v217
        %v219 = vrot.slane %v218, 2
        %v220 = vadd.f32 %v218, %v219
        %v221 = vrot.slane %v220, 1
        %v222 = vadd.f32 %v220, %v221
        %v223 = vlog2.pop %v222
        %v224 = vmul.f32 %v223, 0.6931472
        %v225 = vlaneseq
        %v226 = vshrl.u32 %v225, 7
        %v227 = vlaneseq
        %v228 = vshrl.u32 %v227, 7
        %v229 = vsub.s32 0, %v228
        %v230 = vrot.slane %v204, %v229
        %vm231 = vcmp.eq.s32.totalorder %v226, %v230
        %v232 = vsel %vm231, %v213, 0.0
        %v233 = vsel %vm205, %v232, 0.0
        %v234 = vrot.slane %v233, 4
        %v235 = vadd.f32 %v233, %v234
        %v236 = vrot.slane %v235, 2
        %v237 = vadd.f32 %v235, %v236
        %v238 = vrot.slane %v237, 1
        %v239 = vadd.f32 %v237, %v238
        %v240 = vsub.f32 %v224, %v239
        %vm241 = vcmp.ne.s32.totalorder %v204, 4294967196
        %v242 = vsel %vm241, %v240, 0.0
        %vm243 = vcmask 57344
        %v244 = vsel %vm243, %v242, 0.0
        %245 = vadd.xlane.f32.xlu0 %v244
        %v246 = vpop.xlane.xlu0 %245
        %v247 = vrot.slane %v246, 4
        %v248 = vadd.f32 %v246, %v247
        %v249 = vrot.slane %v248, 2
        %v250 = vadd.f32 %v248, %v249
        %v251 = vrot.slane %v250, 1
        %v252 = vadd.f32 %v250, %v251
        %s253 = vtos %v252
        %v254 = vld [vmem:[%s191] sm:$0x1]
        %v255 = vstv %s253
        %v256 = vadd.f32 %v254, %v255
        %257 = vst [vmem:[%s191] sm:$0x1] %v256
        %s258 = sand.u32 %s95, 1
        %s259 = scalar_lea.sflag [#allocation4], %s258
        %s260 = sand.u32 %s95, 1
        %s261 = scalar_lea.vmem [#allocation5], %s260
        // Predicated region
        $region37: #{tpu_custom_call.1} parent=27 // pred_check
          %p262 = pneg %p105
        $region38: #{tpu_custom_call.1} parent=27 // pred_check_branch
          %264 = sbr.rel (%p262) target = $region40
        $region39: #{tpu_custom_call.1} parent=27 // pred_region
          %s266 = ssub.s32 16, 16
          %267 = vsyncadd %s259, %s266
          %s268 = smul.addr %s23, 16
          %s269 = scalar_lea.hbm %s2, %s268
          %s271 = sshll.u32 %s261, 4
          %s272 = int_to_ptr.vmem [resolvable:$true] %s271
          %274 = dma.vmem_to_hbm [thread:$0]  %s272, 16, %s269, %s259
        $region40: #{tpu_custom_call.1} parent=27 // pred_fallthru
          _
      $region28: #{tpu_custom_call.1} parent=5 // pred_fallthru
        _
      %p275 = scmp.le.s32.totalorder 2, %s14
      // Predicated region
      $region41: #{tpu_custom_call.1} parent=5 // pred_check
        %p276 = pneg %p275
      $region42: #{tpu_custom_call.1} parent=5 // pred_check_branch
        %278 = sbr.rel (%p276) target = $region44
      $region43: #{tpu_custom_call.1} parent=5 // pred_region
        %s279 = ssub.s32 %s14, 2
        // Predicated region
        $region45: #{tpu_custom_call.1} parent=43 // pred_check
          %p280 = pneg %p111
        $region46: #{tpu_custom_call.1} parent=43 // pred_check_branch
          %282 = sbr.rel (%p280) target = $region48
        $region47: #{tpu_custom_call.1} parent=43 // pred_region
          %s283 = sand.u32 %s96, 1
          %s284 = scalar_lea.sflag [#allocation4], %s283
          %s285 = sand.u32 %s96, 1
          %s286 = scalar_lea.vmem [#allocation5], %s285
          %287 = dma.done %s284, 16
        $region48: #{tpu_custom_call.1} parent=43 // pred_fallthru
          _
      $region44: #{tpu_custom_call.1} parent=5 // pred_fallthru
        _
    $region6: #{tpu_custom_call.1} parent=1 // loop_footer
      %s18 = sadd.s32 1, %s14
    $region7: #{tpu_custom_call.1} parent=1 // loop_footer_branch
      %13 = sbr.rel target = $region3
    $region8: #{tpu_custom_call.1} parent=1 // loop_exit
      _
    %288 = vsyncpa [#allocation3], 1
    %s289 = scalar_lea.sflag [#allocation3], 1
    %290 = vsyncpa %s289, 1
    %291 = vsyncpa [#allocation4], 1
    %s292 = scalar_lea.sflag [#allocation4], 1
    %293 = vsyncpa %s292, 1

</llo_original>
